<compile_context>
chip_gen: v7x
topology: tpu7x:2x2x1
jax: 0.10.0
libtpu: 0.0.40
codegen_flags: <defaults>
</compile_context>

<pallas_src>
import functools

import jax
import jax.numpy as jnp
from jax.experimental import pallas as pl
from jax.experimental.pallas import tpu as pltpu

LANE = 128
SUBLANE = 8


def _round_up(n, m):
    return ((n + m - 1) // m) * m


def fc_fused_kernel(x_ref, w_ref, b_ref, o_ref):
    # Single MXU pass: y = x @ W_eff + b_eff  (all normalization folded in).
    o_ref[...] = (
        jnp.dot(x_ref[...], w_ref[...], preferred_element_type=jnp.float32)
        + b_ref[...]
    ).astype(o_ref.dtype)


def fold_params(params):
    """Collapse normalize -> Linear0 -> Linear1 -> Linear2 -> denormalize into
    a single affine (W_eff, b_eff). All operands are static parameters, so
    this is free host/XLA-side precompute outside the kernel."""
    r = 1.0 / (params["in_scale"] + 1e-8)                            # (1, obs)
    w012 = params["w0"] @ params["w1"] @ params["w2"]                # (obs, act)
    b012 = (params["b0"] @ params["w1"] @ params["w2"]
            + params["b1"] @ params["w2"] + params["b2"])            # (1, act)
    w_pre = r.reshape(-1, 1) * w012                                  # (obs, act)
    b_pre = b012 - (params["in_shift"] * r) @ w012                   # (1, act)
    w_eff = w_pre * params["out_scale"]                              # (obs, act)
    b_eff = b_pre * params["out_scale"] + params["out_shift"]        # (1, act)
    return w_eff, b_eff


@functools.partial(jax.jit, static_argnames=("use_bf16",))
def fc_network_forward(x, params, use_bf16=False):
    """x: (B, obs_dim) f32. params: dict of transposed-Linear weights (in,out),
    biases (1,out) and the four (1,dim) transformation vectors."""
    B, obs_dim = x.shape
    act_dim = params["w2"].shape[1]

    w_eff, b_eff = fold_params(params)

    # Lane-dense padding: feature dims -> multiples of 128.
    obs_p = _round_up(obs_dim, LANE)
    act_p = _round_up(act_dim, LANE)

    # Batch tile: 512 rows for large batches (good DMA/compute pipelining),
    # but never more than the (sublane-rounded) batch. VMEM footprint at
    # tb=512: double-buffered x + out tiles ~1 MiB + resident 64 KiB weight,
    # comfortably under v7x's 64 MiB physical / 32 MiB scoped VMEM.
    tb = min(512, _round_up(B, SUBLANE))
    b_p = _round_up(B, tb)

    x_pad = jnp.zeros((b_p, obs_p), jnp.float32).at[:B, :obs_dim].set(x)
    w_pad = jnp.zeros((obs_p, act_p), jnp.float32).at[:obs_dim, :act_dim].set(w_eff)
    b_pad = jnp.zeros((1, act_p), jnp.float32).at[:, :act_dim].set(b_eff)

    if use_bf16:
        # Bandwidth-bound on v6e/v7x: halve HBM bytes on x and feed the MXU
        # native bf16 operands; accumulation stays f32.
        x_pad = x_pad.astype(jnp.bfloat16)
        w_pad = w_pad.astype(jnp.bfloat16)

    out = pl.pallas_call(
        fc_fused_kernel,
        out_shape=jax.ShapeDtypeStruct((b_p, act_p), jnp.float32),
        grid=(b_p // tb,),
        in_specs=[
            pl.BlockSpec((tb, obs_p), lambda i: (i, 0)),      # batch-tiled x
            pl.BlockSpec((obs_p, act_p), lambda i: (0, 0)),   # VMEM-resident W_eff
            pl.BlockSpec((1, act_p), lambda i: (0, 0)),       # VMEM-resident b_eff
        ],
        out_specs=pl.BlockSpec((tb, act_p), lambda i: (i, 0)),
        compiler_params=pltpu.CompilerParams(
            dimension_semantics=("parallel",)),  # v7x: shard batch over 2 TCs
    )(x_pad, w_pad, b_pad)

    # Strip batch padding and the zero-padded output lanes.
    return out[:B, :act_dim]


def init_params(key, obs_dim, act_dim, hidden_sizes=(32, 32)):
    """Deterministic synthetic init mirroring nn.Linear's default
    uniform(-1/sqrt(fan_in), 1/sqrt(fan_in)); weights stored transposed (in,out)."""
    layer_sizes = (obs_dim,) + tuple(hidden_sizes) + (act_dim,)
    params = {}
    keys = jax.random.split(key, 2 * (len(layer_sizes) - 1))
    for i in range(len(layer_sizes) - 1):
        fan_in, fan_out = layer_sizes[i], layer_sizes[i + 1]
        bound = 1.0 / jnp.sqrt(jnp.float32(fan_in))
        params[f"w{i}"] = jax.random.uniform(
            keys[2 * i], (fan_in, fan_out), jnp.float32, -bound, bound)
        params[f"b{i}"] = jax.random.uniform(
            keys[2 * i + 1], (1, fan_out), jnp.float32, -bound, bound)
    # Default transformations (in_shift=None etc. in the reference):
    params["in_shift"] = jnp.zeros((1, obs_dim), jnp.float32)
    params["in_scale"] = jnp.ones((1, obs_dim), jnp.float32)
    params["out_shift"] = jnp.zeros((1, act_dim), jnp.float32)
    params["out_scale"] = jnp.ones((1, act_dim), jnp.float32)
    return params


def reference_forward(x, params):
    """Pure-JAX reference matching the PyTorch forward exactly (unfused)."""
    out = (x - params["in_shift"]) / (params["in_scale"] + 1e-8)
    out = out @ params["w0"] + params["b0"]
    out = out @ params["w1"] + params["b1"]
    out = out @ params["w2"] + params["b2"]
    return out * params["out_scale"] + params["out_shift"]


if __name__ == "__main__":
    key = jax.random.PRNGKey(0)
    k_param, k_x1, k_x2 = jax.random.split(key, 3)

    B, OBS_DIM, ACT_DIM = 8, 16, 8
    HIDDEN = (32, 32)

    params = init_params(k_param, OBS_DIM, ACT_DIM, HIDDEN)

    # Small shape consistent with the module (single batch tile).
    x_small = jax.random.normal(k_x1, (B, OBS_DIM), jnp.float32)
    out_small = jax.block_until_ready(fc_network_forward(x_small, params))
    ref_small = reference_forward(x_small, params)
    assert out_small.shape == (B, ACT_DIM)
    assert jnp.allclose(out_small, ref_small, atol=1e-4, rtol=1e-4), \
        "f32 fused kernel mismatch vs reference (small batch)"

    # Larger batch exercising the tiled / pipelined grid path + batch padding.
    x_big = jax.random.normal(k_x2, (1037, OBS_DIM), jnp.float32)
    out_big = jax.block_until_ready(fc_network_forward(x_big, params))
    ref_big = reference_forward(x_big, params)
    assert out_big.shape == (1037, ACT_DIM)
    assert jnp.allclose(out_big, ref_big, atol=1e-4, rtol=1e-4), \
        "f32 fused kernel mismatch vs reference (tiled batch)"

    # Optional bf16 operand path (v6e/v7x bandwidth lever); looser tolerance.
    out_bf16 = jax.block_until_ready(
        fc_network_forward(x_big, params, use_bf16=True))
    assert jnp.allclose(out_bf16, ref_big, atol=5e-2, rtol=5e-2), \
        "bf16 fused kernel mismatch vs reference"

    print("KERNEL_OK")
</pallas_src>

<mosaic_0001>
module attributes {stable_mosaic.version = 11 : i64} {
  func.func @fc_fused_kernel(%arg0: i32, %arg1: memref<8x128xf32, #tpu.memory_space<vmem>>, %arg2: memref<128x128xf32, #tpu.memory_space<vmem>>, %arg3: memref<1x128xf32, #tpu.memory_space<vmem>>, %arg4: memref<8x128xf32, #tpu.memory_space<vmem>>) attributes {dimension_semantics = [#tpu.dimension_semantics<parallel>], iteration_bounds = array<i64: 1>, scalar_prefetch = 0 : i64, scratch_operands = 0 : i64, tpu.core_type = #tpu.core_type<tc>, window_params = [{transform_indices = @transform_0, window_bounds = array<i64: 8, 128>}, {pipeline_mode = #tpu.pipeline_mode<synchronous>, transform_indices = @transform_1, window_bounds = array<i64: 128, 128>}, {pipeline_mode = #tpu.pipeline_mode<synchronous>, transform_indices = @transform_2, window_bounds = array<i64: 1, 128>}, {transform_indices = @transform_3, window_bounds = array<i64: 8, 128>}]} {
    %c0 = arith.constant 0 : index
    %c0_0 = arith.constant 0 : index
    %0 = vector.load %arg1[%c0, %c0_0] : memref<8x128xf32, #tpu.memory_space<vmem>>, vector<8x128xf32>
    %c0_1 = arith.constant 0 : index
    %c0_2 = arith.constant 0 : index
    %1 = vector.load %arg2[%c0_1, %c0_2] : memref<128x128xf32, #tpu.memory_space<vmem>>, vector<128x128xf32>
    %cst = arith.constant dense<0.000000e+00> : vector<8x128xf32>
    %2 = tpu.matmul %0, %1, %cst {dimension_numbers = #tpu.dot_dimension_numbers<[1], [0], [0], [1], [0, 0, 1, 1], [], []>} : vector<8x128xf32>, vector<128x128xf32>, vector<8x128xf32> -> vector<8x128xf32>
    %c0_3 = arith.constant 0 : index
    %c0_4 = arith.constant 0 : index
    %3 = vector.load %arg3[%c0_3, %c0_4] : memref<1x128xf32, #tpu.memory_space<vmem>>, vector<1x128xf32>
    %4 = vector.broadcast %3 : vector<1x128xf32> to vector<8x128xf32>
    %5 = arith.addf %2, %4 : vector<8x128xf32>
    %c0_5 = arith.constant 0 : index
    %c0_6 = arith.constant 0 : index
    %6 = vector.load %arg4[%c0_5, %c0_6] : memref<8x128xf32, #tpu.memory_space<vmem>>, vector<8x128xf32>
    tpu.vector_store %arg4[%c0_5, %c0_6], %5 {strides = array<i32>} : memref<8x128xf32, #tpu.memory_space<vmem>>, vector<8x128xf32>,
    return
  }
  func.func @transform_0(%arg0: i32) -> (i32, i32) {
    %c0_i32 = arith.constant 0 : i32
    %c0_i32_0 = arith.constant 0 : i32
    return %arg0, %c0_i32 : i32, i32
  }
  func.func @transform_1(%arg0: i32) -> (i32, i32) {
    %c0_i32 = arith.constant 0 : i32
    %c0_i32_0 = arith.constant 0 : i32
    %c0_i32_1 = arith.constant 0 : i32
    return %c0_i32, %c0_i32_0 : i32, i32
  }
  func.func @transform_2(%arg0: i32) -> (i32, i32) {
    %c0_i32 = arith.constant 0 : i32
    %c0_i32_0 = arith.constant 0 : i32
    %c0_i32_1 = arith.constant 0 : i32
    return %c0_i32, %c0_i32_0 : i32, i32
  }
  func.func @transform_3(%arg0: i32) -> (i32, i32) {
    %c0_i32 = arith.constant 0 : i32
    %c0_i32_0 = arith.constant 0 : i32
    return %arg0, %c0_i32 : i32, i32
  }
}

</mosaic_0001>

<llo_original>
// kernel: fc_network_forward.1
$region0: #{fc_network_forward.1}
  #allocation0 [shape = 'u32[]', space=smem, size = 0x4, offset = 0x4, fixed_abs, tag = 'smem constant byte address 0x4 - core index']
  #allocation1 [shape = 'u32[144,128]{1,0:T(1,128)}', space=vmem, size = 0x12000, scoped, tag = 'internal scratch']
  %s0 = inlined_call_operand.vmem [shape: f32[8,128], index: 0, kind: input, shape index: {}]
  %s1 = inlined_call_operand.vmem [shape: f32[128,128], index: 1, kind: input, shape index: {}]
  %s2 = inlined_call_operand.vmem [shape: f32[1,128], index: 2, kind: input, shape index: {}]
  %s3 = inlined_call_operand.hbm [shape: f32[8,128], index: 3, kind: output, shape index: {}]
  %s4 = sld [smem:[#allocation0]]
  $region22: #{fc_network_forward.1} parent=0
    _
  %s6 = ssub.s32 1, %s4
  %s7 = scalar_select 0, %s6, %s4
  $region1: #{fc_network_forward.1} parent=0
    #allocation2 [shape = 'u8[4096]{0}', space=vmem, size = 0x1000, scoped, tag = 'output window, operand 0, single buffered']
    #allocation3 [shape = 's32[1]{0}', space=sflag, size = 0x4, scoped, tag = 'scoped memory for fc_network_forward.1']
    %8 = vsyncpa [#allocation3], 0
    // Predicated region
    $region2: #{fc_network_forward.1} parent=1 // pred_check
      _
    $region3: #{fc_network_forward.1} parent=1 // pred_check_branch
      %10 = sbr.rel (0) target = $region5
    $region4: #{fc_network_forward.1} parent=1 // pred_region
      _
    $region5: #{fc_network_forward.1} parent=1 // pred_fallthru
      _
    // Predicated region
    $region6: #{fc_network_forward.1} parent=1 // pred_check
      _
    $region7: #{fc_network_forward.1} parent=1 // pred_check_branch
      %12 = sbr.rel (0) target = $region9
    $region8: #{fc_network_forward.1} parent=1 // pred_region
      _
    $region9: #{fc_network_forward.1} parent=1 // pred_fallthru
      _
    // Predicated region
    $region10: #{fc_network_forward.1} parent=1 // pred_check
      _
    $region11: #{fc_network_forward.1} parent=1 // pred_check_branch
      %14 = sbr.rel (0) target = $region13
    $region12: #{fc_network_forward.1} parent=1 // pred_region
      _
    $region13: #{fc_network_forward.1} parent=1 // pred_fallthru
      _
    %v15 = vld [vmem:[%s0] sm:$0xff]
    %v16 = vld [vmem:[%s1] sm:$0xff]
    %v17 = vld [vmem:[%s1 + $0x8] sm:$0xff]
    %v18 = vld [vmem:[%s1 + $0x10] sm:$0xff]
    %v19 = vld [vmem:[%s1 + $0x18] sm:$0xff]
    %v20 = vld [vmem:[%s1 + $0x20] sm:$0xff]
    %v21 = vld [vmem:[%s1 + $0x28] sm:$0xff]
    %v22 = vld [vmem:[%s1 + $0x30] sm:$0xff]
    %v23 = vld [vmem:[%s1 + $0x38] sm:$0xff]
    %v24 = vld [vmem:[%s1 + $0x40] sm:$0xff]
    %v25 = vld [vmem:[%s1 + $0x48] sm:$0xff]
    %v26 = vld [vmem:[%s1 + $0x50] sm:$0xff]
    %v27 = vld [vmem:[%s1 + $0x58] sm:$0xff]
    %v28 = vld [vmem:[%s1 + $0x60] sm:$0xff]
    %v29 = vld [vmem:[%s1 + $0x68] sm:$0xff]
    %v30 = vld [vmem:[%s1 + $0x70] sm:$0xff]
    %v31 = vld [vmem:[%s1 + $0x78] sm:$0xff]
    %v32 = vld [vmem:[%s2] sm:$0x1]
    %v34 = vlaneseq
    %v35 = vshrl.u32 %v34, 7
    %v36 = vsub.s32 0, %v35
    %v37 = vrot.slane %v32, %v36
    %39 = vmatprep.subr.mxu0 0.0
    %40 = vmatpush1.msra.mxu0 %v16
    %41 = vmatprep.subr.mxu0 0.0
    %42 = vmatpush1.msra.mxu0 %v17
    %43 = vmatprep.subr.mxu0 0.0
    %44 = vmatpush1.msra.mxu0 %v18
    %45 = vmatprep.subr.mxu0 0.0
    %46 = vmatpush1.msra.mxu0 %v19
    %47 = vmatprep.subr.mxu0 0.0
    %48 = vmatpush1.msra.mxu0 %v20
    %49 = vmatprep.subr.mxu0 0.0
    %50 = vmatpush1.msra.mxu0 %v21
    %51 = vmatprep.subr.mxu0 0.0
    %52 = vmatpush1.msra.mxu0 %v22
    %53 = vmatprep.subr.mxu0 0.0
    %54 = vmatpush1.msra.mxu0 %v23
    %55 = vmatprep.subr.mxu0 0.0
    %56 = vmatpush1.msra.mxu0 %v24
    %57 = vmatprep.subr.mxu0 0.0
    %58 = vmatpush1.msra.mxu0 %v25
    %59 = vmatprep.subr.mxu0 0.0
    %60 = vmatpush1.msra.mxu0 %v26
    %61 = vmatprep.subr.mxu0 0.0
    %62 = vmatpush1.msra.mxu0 %v27
    %63 = vmatprep.subr.mxu0 0.0
    %64 = vmatpush1.msra.mxu0 %v28
    %65 = vmatprep.subr.mxu0 0.0
    %66 = vmatpush1.msra.mxu0 %v29
    %67 = vmatprep.subr.mxu0 0.0
    %68 = vmatpush1.msra.mxu0 %v30
    %69 = vmatprep.subr.mxu0 0.0
    %70 = vmatpush1.msra.mxu0 %v31
    %71 = vmatprep.subr.mxu0 0.0
    %72 = vmatpush1.msra.mxu0 0.0
    %73 = vmatprep.subr.mxu0 0.0
    %74 = vmatpush1.msra.mxu0 0.0
    %75 = vmatprep.subr.mxu0 0.0
    %76 = vmatpush1.msra.mxu0 0.0
    %77 = vmatprep.subr.mxu0 0.0
    %78 = vmatpush1.msra.mxu0 0.0
    %79 = vmatprep.subr.mxu0 0.0
    %80 = vmatpush1.msra.mxu0 0.0
    %81 = vmatprep.subr.mxu0 0.0
    %82 = vmatpush1.msra.mxu0 0.0
    %83 = vmatprep.subr.mxu0 0.0
    %84 = vmatpush1.msra.mxu0 0.0
    %85 = vmatprep.subr.mxu0 0.0
    %86 = vmatpush1.msra.mxu0 0.0
    %87 = vmatprep.subr.mxu0 0.0
    %88 = vmatpush1.msra.mxu0 0.0
    %89 = vmatprep.subr.mxu0 0.0
    %90 = vmatpush1.msra.mxu0 0.0
    %91 = vmatprep.subr.mxu0 0.0
    %92 = vmatpush1.msra.mxu0 0.0
    %93 = vmatprep.subr.mxu0 0.0
    %94 = vmatpush1.msra.mxu0 0.0
    %95 = vmatprep.subr.mxu0 0.0
    %96 = vmatpush1.msra.mxu0 0.0
    %97 = vmatprep.subr.mxu0 0.0
    %98 = vmatpush1.msra.mxu0 0.0
    %99 = vmatprep.subr.mxu0 0.0
    %100 = vmatpush1.msra.mxu0 0.0
    %101 = vmatprep.subr.mxu0 0.0
    %102 = vmatpush1.msra.mxu0 0.0
    %103 = vmatprep.mubr.f32.mxu0 0.0
    %104 = vmatmul.mubr.f32.gmra.mrb[0].mxu0 %v15
    %v105 = vpop.f32.mrb[0].mxu0
    %v106 = vadd.f32 %v37, %v105
    %v107 = vpop.f32.mrb[0].mxu0
    %108 = vdwg.mxu0
    %109 = vst [vmem:[#allocation2] sm:$0xff] %v106
    // Predicated region
    $region14: #{fc_network_forward.1} parent=1 // pred_check
      _
    $region15: #{fc_network_forward.1} parent=1 // pred_check_branch
      %111 = sbr.rel (0) target = $region17
    $region16: #{fc_network_forward.1} parent=1 // pred_region
      %s113 = ssub.s32 128, 128
      %114 = vsyncadd [#allocation3], %s113
      %s116 = sshll.u32 [#allocation2], 4
      %s117 = int_to_ptr.vmem [resolvable:$true] %s116
      %119 = dma.vmem_to_hbm [thread:$0]  %s117, 128, %s3, [#allocation3]
    $region17: #{fc_network_forward.1} parent=1 // pred_fallthru
      _
    // Predicated region
    $region18: #{fc_network_forward.1} parent=1 // pred_check
      _
    $region19: #{fc_network_forward.1} parent=1 // pred_check_branch
      %121 = sbr.rel (0) target = $region21
    $region20: #{fc_network_forward.1} parent=1 // pred_region
      %122 = dma.done [#allocation3], 128
    $region21: #{fc_network_forward.1} parent=1 // pred_fallthru
      _
    %123 = vsyncpa [#allocation3], 1

</llo_original>
